<compile_context>
chip_gen: v5e
topology: v5e:2x2
jax: 0.10.0
libtpu: 0.0.40
codegen_flags: <defaults>
</compile_context>

<pallas_src>
import functools

import jax
import jax.numpy as jnp
from jax.experimental import pallas as pl
from jax.experimental.pallas import tpu as pltpu

# Demo shapes (small but lane/sublane friendly).
B = 16           # batch
TB = 8           # batch block (multiple of f32 sublane = 8)
N_LATENT = 16    # n_input  (latent dimension of z)
N_HIDDEN = 128   # n_hidden
N_GENES = 128    # n_output (data space; lane-dense)
N_CAT = 3        # n_cat_list = [3]


def decoder_scvi_kernel(z_ref, covb_ref, lib_ref,
                        wh_ref, whead_ref, bhead_ref,
                        out_ref, *, n_out):
    # ---- px_decoder: single FCLayers layer: Linear([z, onehot]) -> ReLU ----
    # The one-hot covariate contribution AND the linear bias are pre-folded
    # into covb (a per-sample (TB, H) additive term computed in the wrapper),
    # so only one MXU matmul is needed here.
    z = z_ref[...]
    h = jnp.dot(z, wh_ref[...], preferred_element_type=jnp.float32) + covb_ref[...]
    px = jnp.maximum(h, 0.0)
    # dropout_rate=0 and use_batch_norm=False in DecoderSCVI's FCLayers -> nothing else.

    # ---- fused heads: [scale_logits | px_r | px_dropout], one (H, 3*n_out) matmul ----
    heads = jnp.dot(px, whead_ref[...], preferred_element_type=jnp.float32) + bhead_ref[...]
    scale_logits = heads[:, :n_out]
    px_r = heads[:, n_out:2 * n_out]
    px_dropout = heads[:, 2 * n_out:]

    # softmax over the gene dimension (taken on the n_out-wide slice only)
    m = jnp.max(scale_logits, axis=-1, keepdims=True)
    e = jnp.exp(scale_logits - m)
    px_scale = e / jnp.sum(e, axis=-1, keepdims=True)

    # px_rate = exp(library) * px_scale
    px_rate = jnp.exp(lib_ref[...]) * px_scale

    # single lane-dense output slab: [px_scale | px_rate | px_r | px_dropout]
    out_ref[...] = jnp.concatenate([px_scale, px_rate, px_r, px_dropout], axis=-1)


def init_params(key, n_latent, n_hidden, n_genes, n_cat):
    keys = iter(jax.random.split(key, 16))

    def linear(fan_in_total, shapes):
        # PyTorch nn.Linear default init: U(-1/sqrt(fan_in), 1/sqrt(fan_in)).
        bound = 1.0 / float(fan_in_total) ** 0.5
        return [jax.random.uniform(next(keys), s, jnp.float32, -bound, bound)
                for s in shapes]

    p = {}
    # px_decoder layer 0: Linear(n_latent + n_cat -> n_hidden), split into z- and cov-parts.
    p["w_hidden"], p["w_cov"], p["b_hidden"] = linear(
        n_latent + n_cat,
        [(n_latent, n_hidden), (n_cat, n_hidden), (1, n_hidden)])
    # heads: Linear(n_hidden -> n_genes) x 3
    p["w_scale"], p["b_scale"] = linear(n_hidden, [(n_hidden, n_genes), (1, n_genes)])
    p["w_r"], p["b_r"] = linear(n_hidden, [(n_hidden, n_genes), (1, n_genes)])
    p["w_dropout"], p["b_dropout"] = linear(n_hidden, [(n_hidden, n_genes), (1, n_genes)])
    return p


def decoder_scvi(dispersion, z, library, cat_index, params, *, tb=TB):
    b, n_latent = z.shape
    n_hidden = params["w_hidden"].shape[1]
    n_out = params["w_scale"].shape[1]
    assert b % tb == 0

    # --- wrapper-side glue (not the hot path) ---
    # one_hot(cat) @ W_cov  ==  gather of W_cov rows; fold the Linear bias in too.
    cov_bias = params["b_hidden"] + jnp.take(params["w_cov"], cat_index[:, 0], axis=0)
    # fuse the three heads that share operand px
    w_heads = jnp.concatenate(
        [params["w_scale"], params["w_r"], params["w_dropout"]], axis=1)
    b_heads = jnp.concatenate(
        [params["b_scale"], params["b_r"], params["b_dropout"]], axis=1)

    out = pl.pallas_call(
        functools.partial(decoder_scvi_kernel, n_out=n_out),
        out_shape=jax.ShapeDtypeStruct((b, 4 * n_out), jnp.float32),
        grid_spec=pltpu.PrefetchScalarGridSpec(
            num_scalar_prefetch=0,
            grid=(b // tb,),
            in_specs=[
                pl.BlockSpec((tb, n_latent), lambda i: (i, 0)),      # z block
                pl.BlockSpec((tb, n_hidden), lambda i: (i, 0)),      # cov+bias block
                pl.BlockSpec((tb, 1), lambda i: (i, 0)),             # log-library block
                pl.BlockSpec((n_latent, n_hidden), lambda i: (0, 0)),    # W_hidden (resident)
                pl.BlockSpec((n_hidden, 3 * n_out), lambda i: (0, 0)),   # W_heads  (resident)
                pl.BlockSpec((1, 3 * n_out), lambda i: (0, 0)),          # b_heads  (resident)
            ],
            out_specs=pl.BlockSpec((tb, 4 * n_out), lambda i: (i, 0)),
        ),
        compiler_params=pltpu.CompilerParams(
            dimension_semantics=("parallel",)),
    )(z, cov_bias, library, params["w_hidden"], w_heads, b_heads)

    px_scale = out[:, :n_out]
    px_rate = out[:, n_out:2 * n_out]
    px_r = out[:, 2 * n_out:3 * n_out] if dispersion == "gene-cell" else None
    px_dropout = out[:, 3 * n_out:]
    # TODO(synk): scale_activation='softplus' variant not implemented (default is 'softmax').
    return px_scale, px_r, px_rate, px_dropout


def decoder_scvi_ref(dispersion, z, library, cat_index, params):
    # Pure-JAX reference mirroring the PyTorch forward.
    one_hot = jax.nn.one_hot(cat_index[:, 0], params["w_cov"].shape[0], dtype=jnp.float32)
    px = jnp.maximum(
        z @ params["w_hidden"] + one_hot @ params["w_cov"] + params["b_hidden"], 0.0)
    px_scale = jax.nn.softmax(px @ params["w_scale"] + params["b_scale"], axis=-1)
    px_dropout = px @ params["w_dropout"] + params["b_dropout"]
    px_rate = jnp.exp(library) * px_scale
    px_r = (px @ params["w_r"] + params["b_r"]) if dispersion == "gene-cell" else None
    return px_scale, px_r, px_rate, px_dropout


if __name__ == "__main__":
    key = jax.random.PRNGKey(0)
    kp, kz, kl, kc = jax.random.split(key, 4)

    params = init_params(kp, N_LATENT, N_HIDDEN, N_GENES, N_CAT)
    z = jax.random.normal(kz, (B, N_LATENT), jnp.float32)
    library = 0.5 * jax.random.normal(kl, (B, 1), jnp.float32) + 1.0   # log library size
    cat_index = jax.random.randint(kc, (B, 1), 0, N_CAT)

    outs = decoder_scvi("gene-cell", z, library, cat_index, params)
    jax.block_until_ready(outs)
    px_scale, px_r, px_rate, px_dropout = outs

    assert px_scale.shape == (B, N_GENES)
    assert px_r.shape == (B, N_GENES)
    assert px_rate.shape == (B, N_GENES)
    assert px_dropout.shape == (B, N_GENES)

    # numerical sanity check against the pure-JAX reference
    ref = decoder_scvi_ref("gene-cell", z, library, cat_index, params)
    for got, want in zip(outs, ref):
        assert jnp.allclose(got, want, rtol=2e-3, atol=2e-3), "mismatch vs reference"

    print("KERNEL_OK")
</pallas_src>

<mosaic_0001>
module attributes {stable_mosaic.version = 11 : i64} {
  func.func @decoder_scvi_kernel(%arg0: i32, %arg1: memref<8x16xf32, #tpu.memory_space<vmem>>, %arg2: memref<8x128xf32, #tpu.memory_space<vmem>>, %arg3: memref<8x1xf32, #tpu.memory_space<vmem>>, %arg4: memref<16x128xf32, #tpu.memory_space<vmem>>, %arg5: memref<128x384xf32, #tpu.memory_space<vmem>>, %arg6: memref<1x384xf32, #tpu.memory_space<vmem>>, %arg7: memref<8x512xf32, #tpu.memory_space<vmem>>) attributes {dimension_semantics = [#tpu.dimension_semantics<parallel>], iteration_bounds = array<i64: 2>, scalar_prefetch = 0 : i64, scratch_operands = 0 : i64, tpu.core_type = #tpu.core_type<tc>, window_params = [{transform_indices = @transform_0, window_bounds = array<i64: 8, 16>}, {transform_indices = @transform_1, window_bounds = array<i64: 8, 128>}, {transform_indices = @transform_2, window_bounds = array<i64: 8, 1>}, {pipeline_mode = #tpu.pipeline_mode<synchronous>, transform_indices = @transform_3, window_bounds = array<i64: 16, 128>}, {pipeline_mode = #tpu.pipeline_mode<synchronous>, transform_indices = @transform_4, window_bounds = array<i64: 128, 384>}, {pipeline_mode = #tpu.pipeline_mode<synchronous>, transform_indices = @transform_5, window_bounds = array<i64: 1, 384>}, {transform_indices = @transform_6, window_bounds = array<i64: 8, 512>}]} {
    %c0 = arith.constant 0 : index
    %c0_0 = arith.constant 0 : index
    %0 = vector.load %arg1[%c0, %c0_0] : memref<8x16xf32, #tpu.memory_space<vmem>>, vector<8x16xf32>
    %c0_1 = arith.constant 0 : index
    %c0_2 = arith.constant 0 : index
    %1 = vector.load %arg4[%c0_1, %c0_2] : memref<16x128xf32, #tpu.memory_space<vmem>>, vector<16x128xf32>
    %cst = arith.constant dense<0.000000e+00> : vector<8x128xf32>
    %2 = tpu.matmul %0, %1, %cst {dimension_numbers = #tpu.dot_dimension_numbers<[1], [0], [0], [1], [0, 0, 1, 1], [], []>} : vector<8x16xf32>, vector<16x128xf32>, vector<8x128xf32> -> vector<8x128xf32>
    %c0_3 = arith.constant 0 : index
    %c0_4 = arith.constant 0 : index
    %3 = vector.load %arg2[%c0_3, %c0_4] : memref<8x128xf32, #tpu.memory_space<vmem>>, vector<8x128xf32>
    %4 = arith.addf %2, %3 : vector<8x128xf32>
    %cst_5 = arith.constant 0.000000e+00 : f32
    %5 = vector.broadcast %cst_5 : f32 to vector<8x128xf32>
    %6 = arith.maximumf %4, %5 : vector<8x128xf32>
    %c0_6 = arith.constant 0 : index
    %c0_7 = arith.constant 0 : index
    %7 = vector.load %arg5[%c0_6, %c0_7] : memref<128x384xf32, #tpu.memory_space<vmem>>, vector<128x384xf32>
    %cst_8 = arith.constant dense<0.000000e+00> : vector<8x384xf32>
    %8 = tpu.matmul %6, %7, %cst_8 {dimension_numbers = #tpu.dot_dimension_numbers<[1], [0], [0], [1], [0, 0, 1, 1], [], []>} : vector<8x128xf32>, vector<128x384xf32>, vector<8x384xf32> -> vector<8x384xf32>
    %c0_9 = arith.constant 0 : index
    %c0_10 = arith.constant 0 : index
    %9 = vector.load %arg6[%c0_9, %c0_10] : memref<1x384xf32, #tpu.memory_space<vmem>>, vector<1x384xf32>
    %10 = vector.broadcast %9 : vector<1x384xf32> to vector<8x384xf32>
    %11 = arith.addf %8, %10 : vector<8x384xf32>
    %12 = vector.extract_strided_slice %11 {offsets = [0, 0], sizes = [8, 128], strides = [1, 1]} : vector<8x384xf32> to vector<8x128xf32>
    %13 = vector.extract_strided_slice %11 {offsets = [0, 128], sizes = [8, 128], strides = [1, 1]} : vector<8x384xf32> to vector<8x128xf32>
    %14 = vector.extract_strided_slice %11 {offsets = [0, 256], sizes = [8, 128], strides = [1, 1]} : vector<8x384xf32> to vector<8x128xf32>
    %cst_11 = arith.constant dense<0xFF800000> : vector<8xf32>
    %15 = vector.multi_reduction <maximumf>, %12, %cst_11 [1] : vector<8x128xf32> to vector<8xf32>
    %16 = vector.shape_cast %15 : vector<8xf32> to vector<8x1xf32>
    %17 = vector.broadcast %16 : vector<8x1xf32> to vector<8x128xf32>
    %18 = arith.subf %12, %17 : vector<8x128xf32>
    %19 = math.exp %18 : vector<8x128xf32>
    %cst_12 = arith.constant dense<0.000000e+00> : vector<8xf32>
    %20 = vector.multi_reduction <add>, %19, %cst_12 [1] : vector<8x128xf32> to vector<8xf32>
    %21 = vector.shape_cast %20 : vector<8xf32> to vector<8x1xf32>
    %22 = vector.broadcast %21 : vector<8x1xf32> to vector<8x128xf32>
    %23 = arith.divf %19, %22 : vector<8x128xf32>
    %c0_13 = arith.constant 0 : index
    %c0_14 = arith.constant 0 : index
    %24 = vector.load %arg3[%c0_13, %c0_14] : memref<8x1xf32, #tpu.memory_space<vmem>>, vector<8x1xf32>
    %25 = math.exp %24 : vector<8x1xf32>
    %26 = vector.broadcast %25 : vector<8x1xf32> to vector<8x128xf32>
    %27 = arith.mulf %26, %23 : vector<8x128xf32>
    %28 = tpu.concatenate %23, %27, %13, %14 in 1 : vector<8x128xf32>, vector<8x128xf32>, vector<8x128xf32>, vector<8x128xf32> -> vector<8x512xf32>
    %c0_15 = arith.constant 0 : index
    %c0_16 = arith.constant 0 : index
    %29 = vector.load %arg7[%c0_15, %c0_16] : memref<8x512xf32, #tpu.memory_space<vmem>>, vector<8x512xf32>
    tpu.vector_store %arg7[%c0_15, %c0_16], %28 {strides = array<i32>} : memref<8x512xf32, #tpu.memory_space<vmem>>, vector<8x512xf32>,
    return
  }
  func.func @transform_0(%arg0: i32) -> (i32, i32) {
    %c0_i32 = arith.constant 0 : i32
    %c0_i32_0 = arith.constant 0 : i32
    return %arg0, %c0_i32 : i32, i32
  }
  func.func @transform_1(%arg0: i32) -> (i32, i32) {
    %c0_i32 = arith.constant 0 : i32
    %c0_i32_0 = arith.constant 0 : i32
    return %arg0, %c0_i32 : i32, i32
  }
  func.func @transform_2(%arg0: i32) -> (i32, i32) {
    %c0_i32 = arith.constant 0 : i32
    %c0_i32_0 = arith.constant 0 : i32
    return %arg0, %c0_i32 : i32, i32
  }
  func.func @transform_3(%arg0: i32) -> (i32, i32) {
    %c0_i32 = arith.constant 0 : i32
    %c0_i32_0 = arith.constant 0 : i32
    %c0_i32_1 = arith.constant 0 : i32
    return %c0_i32, %c0_i32_0 : i32, i32
  }
  func.func @transform_4(%arg0: i32) -> (i32, i32) {
    %c0_i32 = arith.constant 0 : i32
    %c0_i32_0 = arith.constant 0 : i32
    %c0_i32_1 = arith.constant 0 : i32
    return %c0_i32, %c0_i32_0 : i32, i32
  }
  func.func @transform_5(%arg0: i32) -> (i32, i32) {
    %c0_i32 = arith.constant 0 : i32
    %c0_i32_0 = arith.constant 0 : i32
    %c0_i32_1 = arith.constant 0 : i32
    return %c0_i32, %c0_i32_0 : i32, i32
  }
  func.func @transform_6(%arg0: i32) -> (i32, i32) {
    %c0_i32 = arith.constant 0 : i32
    %c0_i32_0 = arith.constant 0 : i32
    return %arg0, %c0_i32 : i32, i32
  }
}

</mosaic_0001>

<llo_original>
// kernel: tpu_custom_call.1
$region0: #{tpu_custom_call.1}
  #allocation0 [shape = 'u32[]', space=smem, size = 0x4, offset = 0x4, fixed_abs, tag = 'smem constant byte address 0x4 - core index']
  #allocation1 [shape = 'u32[72,128]{1,0:T(1,128)}', space=vmem, size = 0x9000, scoped, tag = 'internal scratch']
  %s0 = inlined_call_operand.vmem [shape: f32[16,16], index: 0, kind: input, shape index: {}]
  %s1 = inlined_call_operand.hbm [shape: f32[16,128], index: 1, kind: input, shape index: {}]
  %s2 = inlined_call_operand.vmem [shape: f32[16,1], index: 2, kind: input, shape index: {}]
  %s3 = inlined_call_operand.hbm [shape: f32[16,128], index: 3, kind: input, shape index: {}]
  %s4 = inlined_call_operand.hbm [shape: f32[128,384], index: 4, kind: input, shape index: {}]
  %s5 = inlined_call_operand.vmem [shape: f32[1,384], index: 5, kind: input, shape index: {}]
  %s6 = inlined_call_operand.hbm [shape: f32[16,512], index: 6, kind: output, shape index: {}]
  %s7 = sld [smem:[#allocation0]]
  $region69: #{tpu_custom_call.1} parent=0
    _
  %s9 = ssub.s32 1, %s7
  %s10 = scalar_select 0, %s9, %s7
  $region1: #{tpu_custom_call.1} parent=0
    #allocation2 [shape = 'u8[8192]{0}', space=vmem, size = 0x2000, scoped, tag = 'input window, operand 1']
    #allocation3 [shape = 's32[2]{0}', space=sflag, size = 0x8, scoped, tag = 'scoped memory for tpu_custom_call.1']
    #allocation4 [shape = 's32[2]{0}', space=sflag, size = 0x8, scoped, tag = 'scoped memory for tpu_custom_call.1']
    #allocation5 [shape = 'u8[8192]{0}', space=vmem, size = 0x2000, scoped, tag = 'input window, operand 3, single buffered']
    #allocation6 [shape = 's32[1]{0}', space=sflag, size = 0x4, scoped, tag = 'scoped memory for tpu_custom_call.1']
    #allocation7 [shape = 'u8[196608]{0}', space=vmem, size = 0x30000, scoped, tag = 'input window, operand 4, single buffered']
    #allocation8 [shape = 'u8[32768]{0}', space=vmem, size = 0x8000, scoped, tag = 'output window, operand 0']
    %11 = vsyncpa [#allocation3], 0
    %s12 = scalar_lea.sflag [#allocation3], 1
    %13 = vsyncpa %s12, 0
    %14 = vsyncpa [#allocation6], 0
    %15 = vsyncpa [#allocation4], 0
    %s16 = scalar_lea.sflag [#allocation4], 1
    %17 = vsyncpa %s16, 0
    loop: start=0, step=1, limit=4
    $region2: #{tpu_custom_call.1} parent=1 // loop_pre_header
      _
    $region3: #{tpu_custom_call.1} parent=1 // loop_header
      %s19 = sphi 0, %s23
      %p20 = scmp.ge.s32.totalorder %s19, 4
      %s29 = sphi 0, %s31
      %s32 = sphi 0, %s29
      %s33 = sphi 0, %s32
      %s49 = sphi 0, %s33
      %s55 = sphi 0, %s57
      %s58 = sphi 0, %s55
      %s59 = sphi 0, %s58
      %s75 = sphi 0, %s59
      %s81 = sphi 0, %s83
      %s84 = sphi 0, %s81
      %s85 = sphi 0, %s84
      %s101 = sphi 0, %s85
      %s105 = sphi 0, %s105
      %s107 = sphi 0, %s105
      %s108 = sphi 0, %s107
      %s122 = sphi 0, %s108
      %s126 = sphi 0, %s126
      %s128 = sphi 0, %s126
      %s129 = sphi 0, %s128
      %s143 = sphi 0, %s129
      %s147 = sphi 0, %s147
      %s149 = sphi 0, %s147
      %s150 = sphi 0, %s149
      %s164 = sphi 0, %s150
      %s170 = sphi 0, %s172
      %s173 = sphi 0, %s170
      %s174 = sphi 0, %s173
      %s190 = sphi 0, %s174
    $region4: #{tpu_custom_call.1} parent=1 // loop_header_branch
      %22 = sbr.rel (%p20) target = $region8
    $region5: #{tpu_custom_call.1} parent=1 // loop_body
      %s24 = ssub.s32 %s19, 1
      %s25 = ssub.s32 %s19, 2
      %s26 = sadd.s32 %s19, 1
      %s27 = ssub.s32 %s19, %s26
      %p28 = scmp.eq.s32.totalorder %s27, 0
      %s30 = sadd.s32 %s29, 1
      %s31 = scalar_select %p28, %s29, %s30
      %p34 = pneg %p28
      %p35 = scmp.eq.s32.totalorder %s19, 1
      %p36 = por %p34, %p35
      %p37 = scmp.ne.s32.totalorder %s29, %s32
      %p38 = scmp.eq.s32.totalorder %s19, 0
      %p39 = por %p37, %p38
      %p40 = scmp.ne.s32.totalorder %s29, %s32
      %p41 = scmp.eq.s32.totalorder %s24, 1
      %p42 = por %p40, %p41
      %p43 = scmp.ne.s32.totalorder %s32, %s33
      %p44 = scmp.eq.s32.totalorder %s24, 0
      %p45 = por %p43, %p44
      %p46 = scmp.ne.s32.totalorder %s32, %s33
      %p47 = scmp.eq.s32.totalorder %s25, 1
      %p48 = por %p46, %p47
      %p50 = scmp.ne.s32.totalorder %s33, %s49
      %p51 = scmp.eq.s32.totalorder %s25, 0
      %p52 = por %p50, %p51
      %s53 = ssub.s32 %s19, %s26
      %p54 = scmp.eq.s32.totalorder %s53, 0
      %s56 = sadd.s32 %s55, 1
      %s57 = scalar_select %p54, %s55, %s56
      %p60 = pneg %p54
      %p61 = scmp.eq.s32.totalorder %s19, 1
      %p62 = por %p60, %p61
      %p63 = scmp.ne.s32.totalorder %s55, %s58
      %p64 = scmp.eq.s32.totalorder %s19, 0
      %p65 = por %p63, %p64
      %p66 = scmp.ne.s32.totalorder %s55, %s58
      %p67 = scmp.eq.s32.totalorder %s24, 1
      %p68 = por %p66, %p67
      %p69 = scmp.ne.s32.totalorder %s58, %s59
      %p70 = scmp.eq.s32.totalorder %s24, 0
      %p71 = por %p69, %p70
      %p72 = scmp.ne.s32.totalorder %s58, %s59
      %p73 = scmp.eq.s32.totalorder %s25, 1
      %p74 = por %p72, %p73
      %p76 = scmp.ne.s32.totalorder %s59, %s75
      %p77 = scmp.eq.s32.totalorder %s25, 0
      %p78 = por %p76, %p77
      %s79 = ssub.s32 %s19, %s26
      %p80 = scmp.eq.s32.totalorder %s79, 0
      %s82 = sadd.s32 %s81, 1
      %s83 = scalar_select %p80, %s81, %s82
      %p86 = pneg %p80
      %p87 = scmp.eq.s32.totalorder %s19, 1
      %p88 = por %p86, %p87
      %p89 = scmp.ne.s32.totalorder %s81, %s84
      %p90 = scmp.eq.s32.totalorder %s19, 0
      %p91 = por %p89, %p90
      %p92 = scmp.ne.s32.totalorder %s81, %s84
      %p93 = scmp.eq.s32.totalorder %s24, 1
      %p94 = por %p92, %p93
      %p95 = scmp.ne.s32.totalorder %s84, %s85
      %p96 = scmp.eq.s32.totalorder %s24, 0
      %p97 = por %p95, %p96
      %p98 = scmp.ne.s32.totalorder %s84, %s85
      %p99 = scmp.eq.s32.totalorder %s25, 1
      %p100 = por %p98, %p99
      %p102 = scmp.ne.s32.totalorder %s85, %s101
      %p103 = scmp.eq.s32.totalorder %s25, 0
      %p104 = por %p102, %p103
      %s106 = sadd.s32 %s105, 1
      %p109 = scmp.eq.s32.totalorder %s19, 1
      %p110 = scmp.ne.s32.totalorder %s105, %s107
      %p111 = scmp.eq.s32.totalorder %s19, 0
      %p112 = por %p110, %p111
      %p113 = scmp.ne.s32.totalorder %s105, %s107
      %p114 = scmp.eq.s32.totalorder %s24, 1
      %p115 = por %p113, %p114
      %p116 = scmp.ne.s32.totalorder %s107, %s108
      %p117 = scmp.eq.s32.totalorder %s24, 0
      %p118 = por %p116, %p117
      %p119 = scmp.ne.s32.totalorder %s107, %s108
      %p120 = scmp.eq.s32.totalorder %s25, 1
      %p121 = por %p119, %p120
      %p123 = scmp.ne.s32.totalorder %s108, %s122
      %p124 = scmp.eq.s32.totalorder %s25, 0
      %p125 = por %p123, %p124
      %s127 = sadd.s32 %s126, 1
      %p130 = scmp.eq.s32.totalorder %s19, 1
      %p131 = scmp.ne.s32.totalorder %s126, %s128
      %p132 = scmp.eq.s32.totalorder %s19, 0
      %p133 = por %p131, %p132
      %p134 = scmp.ne.s32.totalorder %s126, %s128
      %p135 = scmp.eq.s32.totalorder %s24, 1
      %p136 = por %p134, %p135
      %p137 = scmp.ne.s32.totalorder %s128, %s129
      %p138 = scmp.eq.s32.totalorder %s24, 0
      %p139 = por %p137, %p138
      %p140 = scmp.ne.s32.totalorder %s128, %s129
      %p141 = scmp.eq.s32.totalorder %s25, 1
      %p142 = por %p140, %p141
      %p144 = scmp.ne.s32.totalorder %s129, %s143
      %p145 = scmp.eq.s32.totalorder %s25, 0
      %p146 = por %p144, %p145
      %s148 = sadd.s32 %s147, 1
      %p151 = scmp.eq.s32.totalorder %s19, 1
      %p152 = scmp.ne.s32.totalorder %s147, %s149
      %p153 = scmp.eq.s32.totalorder %s19, 0
      %p154 = por %p152, %p153
      %p155 = scmp.ne.s32.totalorder %s147, %s149
      %p156 = scmp.eq.s32.totalorder %s24, 1
      %p157 = por %p155, %p156
      %p158 = scmp.ne.s32.totalorder %s149, %s150
      %p159 = scmp.eq.s32.totalorder %s24, 0
      %p160 = por %p158, %p159
      %p161 = scmp.ne.s32.totalorder %s149, %s150
      %p162 = scmp.eq.s32.totalorder %s25, 1
      %p163 = por %p161, %p162
      %p165 = scmp.ne.s32.totalorder %s150, %s164
      %p166 = scmp.eq.s32.totalorder %s25, 0
      %p167 = por %p165, %p166
      %s168 = ssub.s32 %s19, %s26
      %p169 = scmp.eq.s32.totalorder %s168, 0
      %s171 = sadd.s32 %s170, 1
      %s172 = scalar_select %p169, %s170, %s171
      %p175 = pneg %p169
      %p176 = scmp.eq.s32.totalorder %s19, 1
      %p177 = por %p175, %p176
      %p178 = scmp.ne.s32.totalorder %s170, %s173
      %p179 = scmp.eq.s32.totalorder %s19, 0
      %p180 = por %p178, %p179
      %p181 = scmp.ne.s32.totalorder %s170, %s173
      %p182 = scmp.eq.s32.totalorder %s24, 1
      %p183 = por %p181, %p182
      %p184 = scmp.ne.s32.totalorder %s173, %s174
      %p185 = scmp.eq.s32.totalorder %s24, 0
      %p186 = por %p184, %p185
      %p187 = scmp.ne.s32.totalorder %s173, %s174
      %p188 = scmp.eq.s32.totalorder %s25, 1
      %p189 = por %p187, %p188
      %p191 = scmp.ne.s32.totalorder %s174, %s190
      %p192 = scmp.eq.s32.totalorder %s25, 0
      %p193 = por %p191, %p192
      %p194 = scmp.le.s32.totalorder 1, %s19
      %p195 = scmp.lt.s32.totalorder %s19, 3
      %p196 = pnand %p194, %p195
      %p197 = pneg %p196
      // Predicated region
      $region9: #{tpu_custom_call.1} parent=5 // pred_check
        _
      $region10: #{tpu_custom_call.1} parent=5 // pred_check_branch
        %199 = sbr.rel (%p196) target = $region12
      $region11: #{tpu_custom_call.1} parent=5 // pred_region
        %s200 = ssub.s32 %s19, 1
        // Predicated region
        $region13: #{tpu_custom_call.1} parent=11 // pred_check
          %p201 = pneg %p118
        $region14: #{tpu_custom_call.1} parent=11 // pred_check_branch
          %203 = sbr.rel (%p201) target = $region16
        $region15: #{tpu_custom_call.1} parent=11 // pred_region
          %205 = vsyncadd [#allocation6], 0
          %s206 = sshll.u32 %s3, 4
          %s207 = int_to_ptr.hbm [resolvable:$true] %s206
          %s208 = sshll.u32 [#allocation5], 4
          %s209 = int_to_ptr.vmem [resolvable:$true] %s208
          %214 = dma.hbm_to_vmem [thread:$0]  %s207, 256, %s209, [#allocation6], 128, 128, 8
        $region16: #{tpu_custom_call.1} parent=11 // pred_fallthru
          _
        // Predicated region
        $region17: #{tpu_custom_call.1} parent=11 // pred_check
          %p215 = pneg %p139
        $region18: #{tpu_custom_call.1} parent=11 // pred_check_branch
          %217 = sbr.rel (%p215) target = $region20
        $region19: #{tpu_custom_call.1} parent=11 // pred_region
          %219 = vsyncadd [#allocation6], 0
          %s220 = sshll.u32 %s4, 4
          %s221 = int_to_ptr.hbm [resolvable:$true] %s220
          %s222 = sshll.u32 [#allocation7], 4
          %s223 = int_to_ptr.vmem [resolvable:$true] %s222
          %228 = dma.hbm_to_vmem [thread:$0]  %s221, 6144, %s223, [#allocation6], 384, 384, 24
        $region20: #{tpu_custom_call.1} parent=11 // pred_fallthru
          _
        // Predicated region
        $region21: #{tpu_custom_call.1} parent=11 // pred_check
          %p229 = pneg %p160
        $region22: #{tpu_custom_call.1} parent=11 // pred_check_branch
          %231 = sbr.rel (%p229) target = $region24
        $region23: #{tpu_custom_call.1} parent=11 // pred_region
          _
        $region24: #{tpu_custom_call.1} parent=11 // pred_fallthru
          _
      $region12: #{tpu_custom_call.1} parent=5 // pred_fallthru
        _
      %p232 = scmp.lt.s32.totalorder %s19, 2
      // Predicated region
      $region25: #{tpu_custom_call.1} parent=5 // pred_check
        %p233 = pneg %p232
      $region26: #{tpu_custom_call.1} parent=5 // pred_check_branch
        %235 = sbr.rel (%p233) target = $region28
      $region27: #{tpu_custom_call.1} parent=5 // pred_region
        // Predicated region
        $region29: #{tpu_custom_call.1} parent=27 // pred_check
          %p236 = pneg %p39
        $region30: #{tpu_custom_call.1} parent=27 // pred_check_branch
          %238 = sbr.rel (%p236) target = $region32
        $region31: #{tpu_custom_call.1} parent=27 // pred_region
          %p239 = scmp.lt.s32.totalorder %s19, 1
          %s240 = scalar_select %p239, %s19, 1
          %s241 = smul.addr %s240, 8
          %s242 = scalar_lea.vmem %s0, %s241
        $region32: #{tpu_custom_call.1} parent=27 // pred_fallthru
          _
        // Predicated region
        $region33: #{tpu_custom_call.1} parent=27 // pred_check
          %p243 = pneg %p65
        $region34: #{tpu_custom_call.1} parent=27 // pred_check_branch
          %245 = sbr.rel (%p243) target = $region36
        $region35: #{tpu_custom_call.1} parent=27 // pred_region
          %s246 = sand.u32 %s55, 1
          %s247 = scalar_lea.sflag [#allocation3], %s246
          %s248 = sand.u32 %s55, 1
          %s249 = smul.addr %s248, 8
          %s250 = scalar_lea.vmem [#allocation2], %s249
          %252 = vsyncadd %s247, 0
          %s253 = smul.addr %s19, 8
          %s254 = scalar_lea.hbm %s1, %s253
          %s256 = sshll.u32 %s254, 4
          %s257 = int_to_ptr.hbm [resolvable:$true] %s256
          %s258 = sshll.u32 %s250, 4
          %s259 = int_to_ptr.vmem [resolvable:$true] %s258
          %261 = dma.hbm_to_vmem [thread:$0]  %s257, 128, %s259, %s247
        $region36: #{tpu_custom_call.1} parent=27 // pred_fallthru
          _
        // Predicated region
        $region37: #{tpu_custom_call.1} parent=27 // pred_check
          %p262 = pneg %p91
        $region38: #{tpu_custom_call.1} parent=27 // pred_check_branch
          %264 = sbr.rel (%p262) target = $region40
        $region39: #{tpu_custom_call.1} parent=27 // pred_region
          %p265 = scmp.lt.s32.totalorder %s19, 1
          %s266 = scalar_select %p265, %s19, 1
          %s267 = smul.addr %s266, 8
          %s268 = scalar_lea.vmem %s2, %s267
        $region40: #{tpu_custom_call.1} parent=27 // pred_fallthru
          _
      $region28: #{tpu_custom_call.1} parent=5 // pred_fallthru
        _
      %p269 = scmp.le.s32.totalorder 1, %s19
      %p270 = scmp.lt.s32.totalorder %s19, 3
      %p271 = pnand %p269, %p270
      %p272 = pneg %p271
      // Predicated region
      $region41: #{tpu_custom_call.1} parent=5 // pred_check
        _
      $region42: #{tpu_custom_call.1} parent=5 // pred_check_branch
        %274 = sbr.rel (%p271) target = $region44
      $region43: #{tpu_custom_call.1} parent=5 // pred_region
        %s275 = ssub.s32 %s19, 1
        %s276 = sand.u32 %s58, 1
        %s277 = scalar_lea.sflag [#allocation3], %s276
        %s278 = sand.u32 %s58, 1
        %s279 = smul.addr %s278, 8
        %s280 = scalar_lea.vmem [#allocation2], %s279
        // Predicated region
        $region45: #{tpu_custom_call.1} parent=43 // pred_check
          %p281 = pneg %p71
        $region46: #{tpu_custom_call.1} parent=43 // pred_check_branch
          %283 = sbr.rel (%p281) target = $region48
        $region47: #{tpu_custom_call.1} parent=43 // pred_region
          %285 = dma.done %s277, 128
        $region48: #{tpu_custom_call.1} parent=43 // pred_fallthru
          _
        // Predicated region
        $region49: #{tpu_custom_call.1} parent=43 // pred_check
          %p286 = pneg %p118
        $region50: #{tpu_custom_call.1} parent=43 // pred_check_branch
          %288 = sbr.rel (%p286) target = $region52
        $region51: #{tpu_custom_call.1} parent=43 // pred_region
          %290 = dma.done [#allocation6], 256
        $region52: #{tpu_custom_call.1} parent=43 // pred_fallthru
          _
        // Predicated region
        $region53: #{tpu_custom_call.1} parent=43 // pred_check
          %p291 = pneg %p139
        $region54: #{tpu_custom_call.1} parent=43 // pred_check_branch
          %293 = sbr.rel (%p291) target = $region56
        $region55: #{tpu_custom_call.1} parent=43 // pred_region
          %295 = dma.done [#allocation6], 6144
        $region56: #{tpu_custom_call.1} parent=43 // pred_fallthru
          _
        %p296 = scmp.lt.s32.totalorder %s24, 1
        %s297 = scalar_select %p296, %s24, 1
        %s298 = smul.addr %s297, 8
        %s299 = scalar_lea.vmem %s0, %s298
        %p300 = pneg %p45
        %p301 = pneg %p42
        %s302 = sand.u32 %s58, 1
        %s303 = scalar_lea.sflag [#allocation3], %s302
        %s304 = sand.u32 %s58, 1
        %s305 = smul.addr %s304, 8
        %s306 = scalar_lea.vmem [#allocation2], %s305
        %p307 = pneg %p71
        %p308 = pneg %p68
        %p309 = scmp.lt.s32.totalorder %s24, 1
        %s310 = scalar_select %p309, %s24, 1
        %s311 = smul.addr %s310, 8
        %s312 = scalar_lea.vmem %s2, %s311
        %p313 = pneg %p97
        %p314 = pneg %p94
        %p315 = pneg %p118
        %p316 = pneg %p115
        %p317 = pneg %p139
        %p318 = pneg %p136
        %p319 = pneg %p160
        %p320 = pneg %p157
        %p321 = pneg %p186
        %p322 = pneg %p183
        %s323 = sand.u32 %s173, 1
        %s324 = scalar_lea.sflag [#allocation4], %s323
        %s325 = sand.u32 %s173, 1
        %s326 = smul.addr %s325, 32
        %s327 = scalar_lea.vmem [#allocation8], %s326
        %p328 = scmp.lt.s32.totalorder %s24, 1
        %s329 = scalar_select %p328, %s24, 1
        %s330 = smul.addr %s329, 8
        %s331 = scalar_lea.vmem %s0, %s330
        %p332 = scmp.lt.s32.totalorder %s24, 1
        %s333 = scalar_select %p332, %s24, 1
        %s334 = smul.addr %s333, 8
        %s335 = scalar_lea.vmem %s2, %s334
        %v336 = vld [vmem:[%s331] sm:$0xff]
        %v337 = vld [vmem:[#allocation5] sm:$0xff]
        %v338 = vld [vmem:[#allocation5 + $0x8] sm:$0xff]
        %v339 = vld [vmem:[%s280] sm:$0xff]
        %vm340 = vcmask 130048
        %v342 = vsel %vm340, %v336, 0
        %344 = vmatpush.msra.mxu0 0.0
        %345 = vmatpush.msra.mxu0 0.0
        %346 = vmatpush.msra.mxu0 0.0
        %347 = vmatpush.msra.mxu0 0.0
        %348 = vmatpush.msra.mxu0 0.0
        %349 = vmatpush.msra.mxu0 0.0
        %350 = vmatpush.msra.mxu0 0.0
        %351 = vmatpush.msra.mxu0 0.0
        %352 = vmatpush.msra.mxu0 0.0
        %353 = vmatpush.msra.mxu0 0.0
        %354 = vmatpush.msra.mxu0 0.0
        %355 = vmatpush.msra.mxu0 0.0
        %356 = vmatpush.msra.mxu0 0.0
        %357 = vmatpush.msra.mxu0 0.0
        %358 = vmatpush.msra.mxu0 %v338
        %359 = vmatpush.msra.mxu0 %v337
        %360 = vmatmul.f32.gmra.mxu0 %v342
        %v361 = vpop.f32.mrf.mxu0
        %v362 = vadd.f32 %v339, %v361
        %363 = vdwg.mxu0
        %v364 = vmax.f32 %v362, 0.0
        %v365 = vld [vmem:[#allocation7] sm:$0xff]
        %v366 = vld [vmem:[#allocation7 + $0x8] sm:$0xff]
        %v367 = vld [vmem:[#allocation7 + $0x10] sm:$0xff]
        %v368 = vld [vmem:[#allocation7 + $0x18] sm:$0xff]
        %v369 = vld [vmem:[#allocation7 + $0x20] sm:$0xff]
        %v370 = vld [vmem:[#allocation7 + $0x28] sm:$0xff]
        %v371 = vld [vmem:[#allocation7 + $0x30] sm:$0xff]
        %v372 = vld [vmem:[#allocation7 + $0x38] sm:$0xff]
        %v373 = vld [vmem:[#allocation7 + $0x40] sm:$0xff]
        %v374 = vld [vmem:[#allocation7 + $0x48] sm:$0xff]
        %v375 = vld [vmem:[#allocation7 + $0x50] sm:$0xff]
        %v376 = vld [vmem:[#allocation7 + $0x58] sm:$0xff]
        %v377 = vld [vmem:[#allocation7 + $0x60] sm:$0xff]
        %v378 = vld [vmem:[#allocation7 + $0x68] sm:$0xff]
        %v379 = vld [vmem:[#allocation7 + $0x70] sm:$0xff]
        %v380 = vld [vmem:[#allocation7 + $0x78] sm:$0xff]
        %v381 = vld [vmem:[#allocation7 + $0x80] sm:$0xff]
        %v382 = vld [vmem:[#allocation7 + $0x88] sm:$0xff]
        %v383 = vld [vmem:[#allocation7 + $0x90] sm:$0xff]
        %v384 = vld [vmem:[#allocation7 + $0x98] sm:$0xff]
        %v385 = vld [vmem:[#allocation7 + $0xa0] sm:$0xff]
        %v386 = vld [vmem:[#allocation7 + $0xa8] sm:$0xff]
        %v387 = vld [vmem:[#allocation7 + $0xb0] sm:$0xff]
        %v388 = vld [vmem:[#allocation7 + $0xb8] sm:$0xff]
        %v389 = vld [vmem:[#allocation7 + $0xc0] sm:$0xff]
        %v390 = vld [vmem:[#allocation7 + $0xc8] sm:$0xff]
        %v391 = vld [vmem:[#allocation7 + $0xd0] sm:$0xff]
        %v392 = vld [vmem:[#allocation7 + $0xd8] sm:$0xff]
        %v393 = vld [vmem:[#allocation7 + $0xe0] sm:$0xff]
        %v394 = vld [vmem:[#allocation7 + $0xe8] sm:$0xff]
        %v395 = vld [vmem:[#allocation7 + $0xf0] sm:$0xff]
        %v396 = vld [vmem:[#allocation7 + $0xf8] sm:$0xff]
        %v397 = vld [vmem:[#allocation7 + $0x100] sm:$0xff]
        %v398 = vld [vmem:[#allocation7 + $0x108] sm:$0xff]
        %v399 = vld [vmem:[#allocation7 + $0x110] sm:$0xff]
        %v400 = vld [vmem:[#allocation7 + $0x118] sm:$0xff]
        %v401 = vld [vmem:[#allocation7 + $0x120] sm:$0xff]
        %v402 = vld [vmem:[#allocation7 + $0x128] sm:$0xff]
        %v403 = vld [vmem:[#allocation7 + $0x130] sm:$0xff]
        %v404 = vld [vmem:[#allocation7 + $0x138] sm:$0xff]
        %v405 = vld [vmem:[#allocation7 + $0x140] sm:$0xff]
        %v406 = vld [vmem:[#allocation7 + $0x148] sm:$0xff]
        %v407 = vld [vmem:[#allocation7 + $0x150] sm:$0xff]
        %v408 = vld [vmem:[#allocation7 + $0x158] sm:$0xff]
        %v409 = vld [vmem:[#allocation7 + $0x160] sm:$0xff]
        %v410 = vld [vmem:[#allocation7 + $0x168] sm:$0xff]
        %v411 = vld [vmem:[#allocation7 + $0x170] sm:$0xff]
        %v412 = vld [vmem:[#allocation7 + $0x178] sm:$0xff]
        %v413 = vld [vmem:[%s5] sm:$0x7]
        %v415 = vperm.slane %v413, 0
        %v416 = vperm.slane %v413, 1
        %v417 = vperm.slane %v413, 2
        %421 = vmatpush.msra.mxu0 %v410
        %422 = vmatpush.msra.mxu0 %v407
        %423 = vmatpush.msra.mxu0 %v404
        %424 = vmatpush.msra.mxu0 %v401
        %425 = vmatpush.msra.mxu0 %v398
        %426 = vmatpush.msra.mxu0 %v395
        %427 = vmatpush.msra.mxu0 %v392
        %428 = vmatpush.msra.mxu0 %v389
        %429 = vmatpush.msra.mxu0 %v386
        %430 = vmatpush.msra.mxu0 %v383
        %431 = vmatpush.msra.mxu0 %v380
        %432 = vmatpush.msra.mxu0 %v377
        %433 = vmatpush.msra.mxu0 %v374
        %434 = vmatpush.msra.mxu0 %v371
        %435 = vmatpush.msra.mxu0 %v368
        %436 = vmatpush.msra.mxu0 %v365
        %437 = vmatmul.f32.gmra.mxu0 %v364
        %v438 = vpop.f32.mrf.mxu0
        %v439 = vadd.f32 %v415, %v438
        %440 = vdwg.mxu0
        %441 = vmatpush.msra.mxu0 %v411
        %442 = vmatpush.msra.mxu0 %v408
        %443 = vmatpush.msra.mxu0 %v405
        %444 = vmatpush.msra.mxu0 %v402
        %445 = vmatpush.msra.mxu0 %v399
        %446 = vmatpush.msra.mxu0 %v396
        %447 = vmatpush.msra.mxu0 %v393
        %448 = vmatpush.msra.mxu0 %v390
        %449 = vmatpush.msra.mxu0 %v387
        %450 = vmatpush.msra.mxu0 %v384
        %451 = vmatpush.msra.mxu0 %v381
        %452 = vmatpush.msra.mxu0 %v378
        %453 = vmatpush.msra.mxu0 %v375
        %454 = vmatpush.msra.mxu0 %v372
        %455 = vmatpush.msra.mxu0 %v369
        %456 = vmatpush.msra.mxu0 %v366
        %457 = vmatmul.f32.gmra.mxu0 %v364
        %v458 = vpop.f32.mrf.mxu0
        %v459 = vadd.f32 %v416, %v458
        %460 = vdwg.mxu0
        %461 = vmatpush.msra.mxu0 %v412
        %462 = vmatpush.msra.mxu0 %v409
        %463 = vmatpush.msra.mxu0 %v406
        %464 = vmatpush.msra.mxu0 %v403
        %465 = vmatpush.msra.mxu0 %v400
        %466 = vmatpush.msra.mxu0 %v397
        %467 = vmatpush.msra.mxu0 %v394
        %468 = vmatpush.msra.mxu0 %v391
        %469 = vmatpush.msra.mxu0 %v388
        %470 = vmatpush.msra.mxu0 %v385
        %471 = vmatpush.msra.mxu0 %v382
        %472 = vmatpush.msra.mxu0 %v379
        %473 = vmatpush.msra.mxu0 %v376
        %474 = vmatpush.msra.mxu0 %v373
        %475 = vmatpush.msra.mxu0 %v370
        %476 = vmatpush.msra.mxu0 %v367
        %477 = vmatmul.f32.gmra.mxu0 %v364
        %v478 = vpop.f32.mrf.mxu0
        %v479 = vadd.f32 %v417, %v478
        %480 = vdwg.mxu0
        %481 = vmax.xlane.f32.xlu0 %v439
        %v482 = vpop.xlane.xlu0 %481
        %v483 = vsub.f32 %v439, %v482
        %v484 = vmul.f32 %v483, 1.442695
        %v485 = vpow.pop %v484
        %486 = vadd.xlane.f32.xlu0 %v485
        %v487 = vpop.xlane.xlu0 %486
        %v488 = vrcp.pop %v487
        %v489 = vmul.f32 %v487, %v488
        %v490 = vsub.f32 1.0, %v489
        %v491 = vmul.f32 %v488, %v490
        %v492 = vadd.f32 %v488, %v491
        %vm493 = vweird.f32 %v487
        %vm494 = vweird.f32 %v488
        %vm495 = vmor %vm493, %vm494
        %v496 = vsel %vm495, %v488, %v492
        %v497 = vand.u32 2147483647, %v487
        %vm498 = vcmp.eq.f32.partialorder %v497, 8.507059e+37
        %v499 = vand.u32 %v487, 2147483648
        %v500 = vor.u32 1.1754944e-38, %v499
        %v501 = vsel %vm498, %v500, %v496
        %v502 = vmul.f32 %v485, %v501
        %v503 = vld [vmem:[%s335] sm:$0xff]
        %v504 = vmul.f32 %v503, 1.442695
        %v505 = vpow.pop %v504
        %507 = vset.pattern.permute.xlu0 0
        %508 = vperm.xlu0 %507, %v505
        %v509 = vpop.permute.xlu0 %508
        %v511 = vmul.f32 %v509, %v502
        %512 = vst [vmem:[%s327] sm:$0xff] %v502
        %513 = vst [vmem:[%s327 + $0x8] sm:$0xff] %v511
        %514 = vst [vmem:[%s327 + $0x10] sm:$0xff] %v459
        %515 = vst [vmem:[%s327 + $0x18] sm:$0xff] %v479
        %s516 = sand.u32 %s173, 1
        %s517 = scalar_lea.sflag [#allocation4], %s516
        %s518 = sand.u32 %s173, 1
        %s519 = smul.addr %s518, 32
        %s520 = scalar_lea.vmem [#allocation8], %s519
        // Predicated region
        $region57: #{tpu_custom_call.1} parent=43 // pred_check
          %p521 = pneg %p183
        $region58: #{tpu_custom_call.1} parent=43 // pred_check_branch
          %523 = sbr.rel (%p521) target = $region60
        $region59: #{tpu_custom_call.1} parent=43 // pred_region
          %525 = vsyncadd %s517, 0
          %s526 = smul.addr %s24, 4
          %s527 = smul.addr %s526, 8
          %s528 = scalar_lea.hbm %s6, %s527
          %s530 = sshll.u32 %s520, 4
          %s531 = int_to_ptr.vmem [resolvable:$true] %s530
          %s532 = sshll.u32 %s528, 4
          %s533 = int_to_ptr.hbm [resolvable:$true] %s532
          %535 = dma.vmem_to_hbm [thread:$0]  %s531, 512, %s533, %s517
        $region60: #{tpu_custom_call.1} parent=43 // pred_fallthru
          _
      $region44: #{tpu_custom_call.1} parent=5 // pred_fallthru
        _
      %p536 = scmp.le.s32.totalorder 2, %s19
      // Predicated region
      $region61: #{tpu_custom_call.1} parent=5 // pred_check
        %p537 = pneg %p536
      $region62: #{tpu_custom_call.1} parent=5 // pred_check_branch
        %539 = sbr.rel (%p537) target = $region64
      $region63: #{tpu_custom_call.1} parent=5 // pred_region
        %s540 = ssub.s32 %s19, 2
        // Predicated region
        $region65: #{tpu_custom_call.1} parent=63 // pred_check
          %p541 = pneg %p189
        $region66: #{tpu_custom_call.1} parent=63 // pred_check_branch
          %543 = sbr.rel (%p541) target = $region68
        $region67: #{tpu_custom_call.1} parent=63 // pred_region
          %s544 = sand.u32 %s174, 1
          %s545 = scalar_lea.sflag [#allocation4], %s544
          %s546 = sand.u32 %s174, 1
          %s547 = smul.addr %s546, 32
          %s548 = scalar_lea.vmem [#allocation8], %s547
          %550 = dma.done %s545, 512
        $region68: #{tpu_custom_call.1} parent=63 // pred_fallthru
          _
      $region64: #{tpu_custom_call.1} parent=5 // pred_fallthru
        _
    $region6: #{tpu_custom_call.1} parent=1 // loop_footer
      %s23 = sadd.s32 1, %s19
    $region7: #{tpu_custom_call.1} parent=1 // loop_footer_branch
      %18 = sbr.rel target = $region3
    $region8: #{tpu_custom_call.1} parent=1 // loop_exit
      _
    %551 = vsyncpa [#allocation3], 1
    %s552 = scalar_lea.sflag [#allocation3], 1
    %553 = vsyncpa %s552, 1
    %554 = vsyncpa [#allocation6], 1
    %555 = vsyncpa [#allocation4], 1
    %s556 = scalar_lea.sflag [#allocation4], 1
    %557 = vsyncpa %s556, 1

</llo_original>
